<compile_context>
chip_gen: v7x
topology: tpu7x:2x2x1
jax: 0.10.0
libtpu: 0.0.40
codegen_flags: <defaults>
</compile_context>

<pallas_src>
import functools

import jax
import jax.numpy as jnp
from jax import lax
from jax.experimental import pallas as pl
from jax.experimental.pallas import tpu as pltpu


def _triplet_kernel(a_rows_ref, p_rows_ref, a_full_ref, p_full_ref, n_full_ref,
                    out_ref, *, tau, tau_w, lamb, thres, tile_b, mm_dtype):
    pid = pl.program_id(0)
    f32 = jnp.float32
    inv_tau = f32(1.0 / tau)
    inv_tau_w = f32(1.0 / tau_w)

    def l2norm(x):
        x = x.astype(f32)
        ss = jnp.sum(x * x, axis=1, keepdims=True)
        return x * lax.rsqrt(jnp.maximum(ss, f32(1e-24)))   # == x / max(||x||,1e-12)

    # Normalized row tile + full column-side operands.
    a_rows = l2norm(a_rows_ref[...])          # [TB, D] f32
    p_rows = l2norm(p_rows_ref[...])          # [TB, D] f32
    a_full = l2norm(a_full_ref[...])          # [B,  D] f32
    p_full = l2norm(p_full_ref[...])          # [B,  D] f32
    n_full = l2norm(n_full_ref[...])          # [B,  D] f32

    def nt_dot(lhs, rhs):
        # [TB, D] x [B, D] -> [TB, B] : NT form, no materialized transpose.
        return lax.dot_general(
            lhs.astype(mm_dtype), rhs.astype(mm_dtype),
            dimension_numbers=(((1,), (1,)), ((), ())),
            preferred_element_type=jnp.float32)

    # ---- D = sum(exp(S_an/t)) + sum(exp(S_ap/t)) + sum(exp(S_aa/t)) - diag ----
    # S_an is consumed immediately, so at most two [TB,B] sims stay live.
    s_an = nt_dot(a_rows, n_full)
    D = jnp.sum(jnp.exp(s_an * inv_tau), axis=1, keepdims=True)

    s_ap = nt_dot(a_rows, p_full)             # reused for tau and tau_w
    D = D + jnp.sum(jnp.exp(s_ap * inv_tau), axis=1, keepdims=True)

    s_aa = nt_dot(a_rows, a_full)             # reused for tau and tau_w
    diag_aa = jnp.sum(a_rows * a_rows, axis=1, keepdims=True)   # ~1 after l2norm
    D = (D + jnp.sum(jnp.exp(s_aa * inv_tau), axis=1, keepdims=True)
           - jnp.exp(diag_aa * inv_tau))

    logD = jnp.log(D)                         # [TB, 1]

    # Global diagonal mask for this row tile (row index offset by tile origin).
    row = lax.broadcasted_iota(jnp.int32, s_ap.shape, 0) + pid * tile_b
    col = lax.broadcasted_iota(jnp.int32, s_ap.shape, 1)
    on_diag = row == col                      # bool [TB, B]

    def masked_weight(s):
        t = jnp.where(on_diag, f32(0.0), jnp.exp(s * inv_tau_w))
        inv_row = 1.0 / jnp.sum(t, axis=1, keepdims=True)
        w = t * inv_row
        if thres is not None:
            w = jnp.where(w >= f32(thres), w, f32(0.0))
        return w

    # term1 = -log(diag(exp(S_ap/tau)) / D) = logD - diag(S_ap)/tau
    diag_ap = jnp.sum(a_rows * p_rows, axis=1, keepdims=True)
    term1 = logD - diag_ap * inv_tau

    # -log(exp(S/tau)/D) = logD - S/tau  (no B*B transcendentals)
    w1 = masked_weight(s_ap)
    term2 = jnp.sum((logD - s_ap * inv_tau) * w1, axis=1, keepdims=True)
    w2 = masked_weight(s_aa)
    term3 = jnp.sum((logD - s_aa * inv_tau) * w2, axis=1, keepdims=True)

    triplet = (term1 + lamb * (term2 + term3) * 0.5) * f32(1.0 / (1.0 + lamb))
    out_ref[...] = triplet                    # per-row losses for this tile


def _pick_row_tile(batch):
    # Largest "nice" row tile <= 256 that divides the batch; 256-aligned on
    # v6e/v7x-friendly sizes, still fits v7x's smaller VMEM with the
    # ~2-3 live [TB, B] f32 slabs.  Falls back to a single tile.
    for t in (256, 128, 64, 32, 16, 8):
        if batch % t == 0:
            return t
    return batch


def triplet_loss_latent_cossim_v3(anchor, pos, neg, *,
                                  temperature=1.0, temperature_weight=1.0,
                                  lamb=1.0, thres_weight=None,
                                  reduction="mean", row_tile=None,
                                  matmul_dtype=None):
    """Pallas equivalent of TripletLossInLatentSpaceCosSimv3.forward.

    anchor/pos/neg: [B, D] float arrays.  Returns the reduced scalar loss.
    """
    if reduction not in ("mean", "sum"):
        raise Exception("Invalid reduction: {}".format(reduction))
    B, D = anchor.shape
    assert pos.shape == (B, D) and neg.shape == (B, D)

    tile_b = row_tile if row_tile is not None else _pick_row_tile(B)
    if B % tile_b != 0:
        tile_b = B
    num_tiles = B // tile_b

    if matmul_dtype is None:
        # bf16 inputs -> bf16 MXU operands (f32 accumulation); f32 stays f32.
        matmul_dtype = jnp.bfloat16 if anchor.dtype == jnp.bfloat16 else jnp.float32

    kernel = functools.partial(
        _triplet_kernel,
        tau=float(temperature),
        tau_w=float(temperature_weight),
        lamb=float(lamb),
        thres=None if thres_weight is None else float(thres_weight),
        tile_b=tile_b,
        mm_dtype=matmul_dtype)

    itemsize = jnp.dtype(anchor.dtype).itemsize
    cost = pl.CostEstimate(
        flops=int(6 * B * B * D + 16 * B * B),
        transcendentals=int(5 * B * B + 4 * B),
        bytes_accessed=int(itemsize * B * D * (3 * num_tiles + 2) + 4 * B))

    rows_spec = pl.BlockSpec((tile_b, D), lambda i: (i, 0))
    full_spec = pl.BlockSpec((B, D), lambda i: (0, 0))

    per_row = pl.pallas_call(
        kernel,
        out_shape=jax.ShapeDtypeStruct((B, 1), jnp.float32),
        grid_spec=pltpu.PrefetchScalarGridSpec(
            num_scalar_prefetch=0,
            grid=(num_tiles,),
            in_specs=[rows_spec, rows_spec, full_spec, full_spec, full_spec],
            out_specs=pl.BlockSpec((tile_b, 1), lambda i: (i, 0))),
        compiler_params=pltpu.CompilerParams(
            dimension_semantics=("parallel",)),
        cost_estimate=cost,
    )(anchor, pos, anchor, pos, neg)

    total = jnp.sum(per_row)
    if reduction == "mean":
        return total / jnp.float32(B)
    return total


def _reference(anchor, pos, neg, tau=1.0, tau_w=1.0, lamb=1.0, thres=None,
               reduction="mean"):
    # Pure-JAX reference mirroring the PyTorch module literally.
    def l2norm(x):
        nrm = jnp.sqrt(jnp.sum(x * x, axis=1, keepdims=True))
        return x / jnp.maximum(nrm, 1e-12)

    a, p, n = l2norm(anchor), l2norm(pos), l2norm(neg)
    B = a.shape[0]
    eye = jnp.eye(B, dtype=a.dtype)
    t1 = jnp.exp(a @ n.T / tau)
    t2 = jnp.exp(a @ p.T / tau)
    t3 = jnp.exp(a @ a.T / tau)
    Dv = t1.sum(1) + t2.sum(1) + t3.sum(1) - jnp.diagonal(t3)

    def mw(x1, x2):
        t = jnp.exp(x1 @ x2.T / tau_w) * (1.0 - eye)
        w = t / t.sum(1, keepdims=True)
        if thres is not None:
            w = w * (w >= thres)
        return w

    w1, w2 = mw(a, p), mw(a, a)
    term1 = -jnp.log(jnp.diagonal(t2) / Dv)
    term2 = jnp.sum(-jnp.log(t2 / Dv[:, None]) * w1, axis=1)
    term3 = jnp.sum(-jnp.log(t3 / Dv[:, None]) * w2, axis=1)
    trip = (term1 + lamb * (term2 + term3) * 0.5) / (1.0 + lamb)
    return jnp.mean(trip) if reduction == "mean" else jnp.sum(trip)


if __name__ == "__main__":
    # Case 1: default hyper-params, single row tile.
    B, D = 8, 32
    ka, kp, kn = jax.random.split(jax.random.PRNGKey(0), 3)
    anchor = jax.random.normal(ka, (B, D), dtype=jnp.float32)
    pos = jax.random.normal(kp, (B, D), dtype=jnp.float32)
    neg = jax.random.normal(kn, (B, D), dtype=jnp.float32)

    out = jax.block_until_ready(triplet_loss_latent_cossim_v3(anchor, pos, neg))
    ref = _reference(anchor, pos, neg)
    assert jnp.allclose(out, ref, rtol=2e-5, atol=1e-6), (out, ref)

    # Case 2: multi-tile grid (2 row tiles), threshold, sum reduction, non-unit taus.
    B2, D2 = 16, 32
    k2a, k2p, k2n = jax.random.split(jax.random.PRNGKey(0), 3)
    anchor2 = jax.random.normal(k2a, (B2, D2), dtype=jnp.float32)
    pos2 = jax.random.normal(k2p, (B2, D2), dtype=jnp.float32)
    neg2 = jax.random.normal(k2n, (B2, D2), dtype=jnp.float32)

    out2 = jax.block_until_ready(triplet_loss_latent_cossim_v3(
        anchor2, pos2, neg2, temperature=0.7, temperature_weight=0.5,
        lamb=0.5, thres_weight=0.05, reduction="sum", row_tile=8))
    ref2 = _reference(anchor2, pos2, neg2, tau=0.7, tau_w=0.5, lamb=0.5,
                      thres=0.05, reduction="sum")
    assert jnp.allclose(out2, ref2, rtol=2e-5, atol=1e-6), (out2, ref2)

    print("KERNEL_OK")
</pallas_src>

<mosaic_0001>
module attributes {stable_mosaic.version = 11 : i64} {
  func.func @_triplet_kernel(%arg0: i32, %arg1: memref<8x32xf32, #tpu.memory_space<vmem>>, %arg2: memref<8x32xf32, #tpu.memory_space<vmem>>, %arg3: memref<8x32xf32, #tpu.memory_space<vmem>>, %arg4: memref<8x32xf32, #tpu.memory_space<vmem>>, %arg5: memref<8x32xf32, #tpu.memory_space<vmem>>, %arg6: memref<8x1xf32, #tpu.memory_space<vmem>>) attributes {dimension_semantics = [#tpu.dimension_semantics<parallel>], iteration_bounds = array<i64: 1>, scalar_prefetch = 0 : i64, scratch_operands = 0 : i64, tpu.core_type = #tpu.core_type<tc>, window_params = [{transform_indices = @transform_0, window_bounds = array<i64: 8, 32>}, {transform_indices = @transform_1, window_bounds = array<i64: 8, 32>}, {pipeline_mode = #tpu.pipeline_mode<synchronous>, transform_indices = @transform_2, window_bounds = array<i64: 8, 32>}, {pipeline_mode = #tpu.pipeline_mode<synchronous>, transform_indices = @transform_3, window_bounds = array<i64: 8, 32>}, {pipeline_mode = #tpu.pipeline_mode<synchronous>, transform_indices = @transform_4, window_bounds = array<i64: 8, 32>}, {transform_indices = @transform_5, window_bounds = array<i64: 8, 1>}]} {
    %c0 = arith.constant 0 : index
    %c0_0 = arith.constant 0 : index
    %0 = vector.load %arg1[%c0, %c0_0] : memref<8x32xf32, #tpu.memory_space<vmem>>, vector<8x32xf32>
    %1 = arith.mulf %0, %0 : vector<8x32xf32>
    %cst = arith.constant dense<0.000000e+00> : vector<8xf32>
    %2 = vector.multi_reduction <add>, %1, %cst [1] : vector<8x32xf32> to vector<8xf32>
    %3 = vector.shape_cast %2 : vector<8xf32> to vector<8x1xf32>
    %cst_1 = arith.constant 1.000000e-24 : f32
    %4 = vector.broadcast %cst_1 : f32 to vector<8x1xf32>
    %5 = arith.maximumf %3, %4 : vector<8x1xf32>
    %6 = math.rsqrt %5 : vector<8x1xf32>
    %7 = vector.broadcast %6 : vector<8x1xf32> to vector<8x32xf32>
    %8 = arith.mulf %0, %7 : vector<8x32xf32>
    %c0_2 = arith.constant 0 : index
    %c0_3 = arith.constant 0 : index
    %9 = vector.load %arg2[%c0_2, %c0_3] : memref<8x32xf32, #tpu.memory_space<vmem>>, vector<8x32xf32>
    %10 = arith.mulf %9, %9 : vector<8x32xf32>
    %cst_4 = arith.constant dense<0.000000e+00> : vector<8xf32>
    %11 = vector.multi_reduction <add>, %10, %cst_4 [1] : vector<8x32xf32> to vector<8xf32>
    %12 = vector.shape_cast %11 : vector<8xf32> to vector<8x1xf32>
    %cst_5 = arith.constant 1.000000e-24 : f32
    %13 = vector.broadcast %cst_5 : f32 to vector<8x1xf32>
    %14 = arith.maximumf %12, %13 : vector<8x1xf32>
    %15 = math.rsqrt %14 : vector<8x1xf32>
    %16 = vector.broadcast %15 : vector<8x1xf32> to vector<8x32xf32>
    %17 = arith.mulf %9, %16 : vector<8x32xf32>
    %c0_6 = arith.constant 0 : index
    %c0_7 = arith.constant 0 : index
    %18 = vector.load %arg3[%c0_6, %c0_7] : memref<8x32xf32, #tpu.memory_space<vmem>>, vector<8x32xf32>
    %19 = arith.mulf %18, %18 : vector<8x32xf32>
    %cst_8 = arith.constant dense<0.000000e+00> : vector<8xf32>
    %20 = vector.multi_reduction <add>, %19, %cst_8 [1] : vector<8x32xf32> to vector<8xf32>
    %21 = vector.shape_cast %20 : vector<8xf32> to vector<8x1xf32>
    %cst_9 = arith.constant 1.000000e-24 : f32
    %22 = vector.broadcast %cst_9 : f32 to vector<8x1xf32>
    %23 = arith.maximumf %21, %22 : vector<8x1xf32>
    %24 = math.rsqrt %23 : vector<8x1xf32>
    %25 = vector.broadcast %24 : vector<8x1xf32> to vector<8x32xf32>
    %26 = arith.mulf %18, %25 : vector<8x32xf32>
    %c0_10 = arith.constant 0 : index
    %c0_11 = arith.constant 0 : index
    %27 = vector.load %arg4[%c0_10, %c0_11] : memref<8x32xf32, #tpu.memory_space<vmem>>, vector<8x32xf32>
    %28 = arith.mulf %27, %27 : vector<8x32xf32>
    %cst_12 = arith.constant dense<0.000000e+00> : vector<8xf32>
    %29 = vector.multi_reduction <add>, %28, %cst_12 [1] : vector<8x32xf32> to vector<8xf32>
    %30 = vector.shape_cast %29 : vector<8xf32> to vector<8x1xf32>
    %cst_13 = arith.constant 1.000000e-24 : f32
    %31 = vector.broadcast %cst_13 : f32 to vector<8x1xf32>
    %32 = arith.maximumf %30, %31 : vector<8x1xf32>
    %33 = math.rsqrt %32 : vector<8x1xf32>
    %34 = vector.broadcast %33 : vector<8x1xf32> to vector<8x32xf32>
    %35 = arith.mulf %27, %34 : vector<8x32xf32>
    %c0_14 = arith.constant 0 : index
    %c0_15 = arith.constant 0 : index
    %36 = vector.load %arg5[%c0_14, %c0_15] : memref<8x32xf32, #tpu.memory_space<vmem>>, vector<8x32xf32>
    %37 = arith.mulf %36, %36 : vector<8x32xf32>
    %cst_16 = arith.constant dense<0.000000e+00> : vector<8xf32>
    %38 = vector.multi_reduction <add>, %37, %cst_16 [1] : vector<8x32xf32> to vector<8xf32>
    %39 = vector.shape_cast %38 : vector<8xf32> to vector<8x1xf32>
    %cst_17 = arith.constant 1.000000e-24 : f32
    %40 = vector.broadcast %cst_17 : f32 to vector<8x1xf32>
    %41 = arith.maximumf %39, %40 : vector<8x1xf32>
    %42 = math.rsqrt %41 : vector<8x1xf32>
    %43 = vector.broadcast %42 : vector<8x1xf32> to vector<8x32xf32>
    %44 = arith.mulf %36, %43 : vector<8x32xf32>
    %cst_18 = arith.constant dense<0.000000e+00> : vector<8x8xf32>
    %45 = tpu.matmul %8, %44, %cst_18 {dimension_numbers = #tpu.dot_dimension_numbers<[1], [1], [0], [0], [0, 0, 1, 0], [], []>} : vector<8x32xf32>, vector<8x32xf32>, vector<8x8xf32> -> vector<8x8xf32>
    %cst_19 = arith.constant 1.000000e+00 : f32
    %46 = vector.broadcast %cst_19 : f32 to vector<8x8xf32>
    %47 = arith.mulf %45, %46 : vector<8x8xf32>
    %48 = math.exp %47 : vector<8x8xf32>
    %cst_20 = arith.constant dense<0.000000e+00> : vector<8xf32>
    %49 = vector.multi_reduction <add>, %48, %cst_20 [1] : vector<8x8xf32> to vector<8xf32>
    %50 = vector.shape_cast %49 : vector<8xf32> to vector<8x1xf32>
    %cst_21 = arith.constant dense<0.000000e+00> : vector<8x8xf32>
    %51 = tpu.matmul %8, %35, %cst_21 {dimension_numbers = #tpu.dot_dimension_numbers<[1], [1], [0], [0], [0, 0, 1, 0], [], []>} : vector<8x32xf32>, vector<8x32xf32>, vector<8x8xf32> -> vector<8x8xf32>
    %cst_22 = arith.constant 1.000000e+00 : f32
    %52 = vector.broadcast %cst_22 : f32 to vector<8x8xf32>
    %53 = arith.mulf %51, %52 : vector<8x8xf32>
    %54 = math.exp %53 : vector<8x8xf32>
    %cst_23 = arith.constant dense<0.000000e+00> : vector<8xf32>
    %55 = vector.multi_reduction <add>, %54, %cst_23 [1] : vector<8x8xf32> to vector<8xf32>
    %56 = vector.shape_cast %55 : vector<8xf32> to vector<8x1xf32>
    %57 = arith.addf %50, %56 : vector<8x1xf32>
    %cst_24 = arith.constant dense<0.000000e+00> : vector<8x8xf32>
    %58 = tpu.matmul %8, %26, %cst_24 {dimension_numbers = #tpu.dot_dimension_numbers<[1], [1], [0], [0], [0, 0, 1, 0], [], []>} : vector<8x32xf32>, vector<8x32xf32>, vector<8x8xf32> -> vector<8x8xf32>
    %59 = arith.mulf %8, %8 : vector<8x32xf32>
    %cst_25 = arith.constant dense<0.000000e+00> : vector<8xf32>
    %60 = vector.multi_reduction <add>, %59, %cst_25 [1] : vector<8x32xf32> to vector<8xf32>
    %61 = vector.shape_cast %60 : vector<8xf32> to vector<8x1xf32>
    %cst_26 = arith.constant 1.000000e+00 : f32
    %62 = vector.broadcast %cst_26 : f32 to vector<8x8xf32>
    %63 = arith.mulf %58, %62 : vector<8x8xf32>
    %64 = math.exp %63 : vector<8x8xf32>
    %cst_27 = arith.constant dense<0.000000e+00> : vector<8xf32>
    %65 = vector.multi_reduction <add>, %64, %cst_27 [1] : vector<8x8xf32> to vector<8xf32>
    %66 = vector.shape_cast %65 : vector<8xf32> to vector<8x1xf32>
    %67 = arith.addf %57, %66 : vector<8x1xf32>
    %cst_28 = arith.constant 1.000000e+00 : f32
    %68 = vector.broadcast %cst_28 : f32 to vector<8x1xf32>
    %69 = arith.mulf %61, %68 : vector<8x1xf32>
    %70 = math.exp %69 : vector<8x1xf32>
    %71 = arith.subf %67, %70 : vector<8x1xf32>
    %72 = math.log %71 : vector<8x1xf32>
    %73 = tpu.iota {dimensions = array<i32: 0>} : vector<8x8xi32>
    %c8_i32 = arith.constant 8 : i32
    %74 = arith.muli %arg0, %c8_i32 : i32
    %75 = vector.broadcast %74 : i32 to vector<8x8xi32>
    %76 = arith.addi %73, %75 : vector<8x8xi32>
    %77 = tpu.iota {dimensions = array<i32: 1>} : vector<8x8xi32>
    %78 = arith.cmpi eq, %76, %77 : vector<8x8xi32>
    %79 = arith.mulf %8, %17 : vector<8x32xf32>
    %cst_29 = arith.constant dense<0.000000e+00> : vector<8xf32>
    %80 = vector.multi_reduction <add>, %79, %cst_29 [1] : vector<8x32xf32> to vector<8xf32>
    %81 = vector.shape_cast %80 : vector<8xf32> to vector<8x1xf32>
    %cst_30 = arith.constant 1.000000e+00 : f32
    %82 = vector.broadcast %cst_30 : f32 to vector<8x1xf32>
    %83 = arith.mulf %81, %82 : vector<8x1xf32>
    %84 = arith.subf %72, %83 : vector<8x1xf32>
    %cst_31 = arith.constant 1.000000e+00 : f32
    %85 = vector.broadcast %cst_31 : f32 to vector<8x8xf32>
    %86 = arith.mulf %51, %85 : vector<8x8xf32>
    %87 = math.exp %86 : vector<8x8xf32>
    %cst_32 = arith.constant 0.000000e+00 : f32
    %88 = vector.broadcast %cst_32 : f32 to vector<8x8xf32>
    %89 = arith.select %78, %88, %87 : vector<8x8xi1>, vector<8x8xf32>
    %cst_33 = arith.constant dense<0.000000e+00> : vector<8xf32>
    %90 = vector.multi_reduction <add>, %89, %cst_33 [1] : vector<8x8xf32> to vector<8xf32>
    %91 = vector.shape_cast %90 : vector<8xf32> to vector<8x1xf32>
    %cst_34 = arith.constant 1.000000e+00 : f32
    %92 = vector.broadcast %cst_34 : f32 to vector<8x1xf32>
    %93 = arith.divf %92, %91 : vector<8x1xf32>
    %94 = vector.broadcast %93 : vector<8x1xf32> to vector<8x8xf32>
    %95 = arith.mulf %89, %94 : vector<8x8xf32>
    %cst_35 = arith.constant 1.000000e+00 : f32
    %96 = vector.broadcast %cst_35 : f32 to vector<8x8xf32>
    %97 = arith.mulf %51, %96 : vector<8x8xf32>
    %98 = vector.broadcast %72 : vector<8x1xf32> to vector<8x8xf32>
    %99 = arith.subf %98, %97 : vector<8x8xf32>
    %100 = arith.mulf %99, %95 : vector<8x8xf32>
    %cst_36 = arith.constant dense<0.000000e+00> : vector<8xf32>
    %101 = vector.multi_reduction <add>, %100, %cst_36 [1] : vector<8x8xf32> to vector<8xf32>
    %102 = vector.shape_cast %101 : vector<8xf32> to vector<8x1xf32>
    %cst_37 = arith.constant 1.000000e+00 : f32
    %103 = vector.broadcast %cst_37 : f32 to vector<8x8xf32>
    %104 = arith.mulf %58, %103 : vector<8x8xf32>
    %105 = math.exp %104 : vector<8x8xf32>
    %cst_38 = arith.constant 0.000000e+00 : f32
    %106 = vector.broadcast %cst_38 : f32 to vector<8x8xf32>
    %107 = arith.select %78, %106, %105 : vector<8x8xi1>, vector<8x8xf32>
    %cst_39 = arith.constant dense<0.000000e+00> : vector<8xf32>
    %108 = vector.multi_reduction <add>, %107, %cst_39 [1] : vector<8x8xf32> to vector<8xf32>
    %109 = vector.shape_cast %108 : vector<8xf32> to vector<8x1xf32>
    %cst_40 = arith.constant 1.000000e+00 : f32
    %110 = vector.broadcast %cst_40 : f32 to vector<8x1xf32>
    %111 = arith.divf %110, %109 : vector<8x1xf32>
    %112 = vector.broadcast %111 : vector<8x1xf32> to vector<8x8xf32>
    %113 = arith.mulf %107, %112 : vector<8x8xf32>
    %cst_41 = arith.constant 1.000000e+00 : f32
    %114 = vector.broadcast %cst_41 : f32 to vector<8x8xf32>
    %115 = arith.mulf %58, %114 : vector<8x8xf32>
    %116 = vector.broadcast %72 : vector<8x1xf32> to vector<8x8xf32>
    %117 = arith.subf %116, %115 : vector<8x8xf32>
    %118 = arith.mulf %117, %113 : vector<8x8xf32>
    %cst_42 = arith.constant dense<0.000000e+00> : vector<8xf32>
    %119 = vector.multi_reduction <add>, %118, %cst_42 [1] : vector<8x8xf32> to vector<8xf32>
    %120 = vector.shape_cast %119 : vector<8xf32> to vector<8x1xf32>
    %121 = arith.addf %102, %120 : vector<8x1xf32>
    %cst_43 = arith.constant 1.000000e+00 : f32
    %122 = vector.broadcast %cst_43 : f32 to vector<8x1xf32>
    %123 = arith.mulf %122, %121 : vector<8x1xf32>
    %cst_44 = arith.constant 5.000000e-01 : f32
    %124 = vector.broadcast %cst_44 : f32 to vector<8x1xf32>
    %125 = arith.mulf %123, %124 : vector<8x1xf32>
    %126 = arith.addf %84, %125 : vector<8x1xf32>
    %cst_45 = arith.constant 5.000000e-01 : f32
    %127 = vector.broadcast %cst_45 : f32 to vector<8x1xf32>
    %128 = arith.mulf %126, %127 : vector<8x1xf32>
    %c0_46 = arith.constant 0 : index
    %c0_47 = arith.constant 0 : index
    %129 = vector.load %arg6[%c0_46, %c0_47] : memref<8x1xf32, #tpu.memory_space<vmem>>, vector<8x1xf32>
    tpu.vector_store %arg6[%c0_46, %c0_47], %128 {strides = array<i32>} : memref<8x1xf32, #tpu.memory_space<vmem>>, vector<8x1xf32>,
    return
  }
  func.func @transform_0(%arg0: i32) -> (i32, i32) {
    %c0_i32 = arith.constant 0 : i32
    %c0_i32_0 = arith.constant 0 : i32
    return %arg0, %c0_i32 : i32, i32
  }
  func.func @transform_1(%arg0: i32) -> (i32, i32) {
    %c0_i32 = arith.constant 0 : i32
    %c0_i32_0 = arith.constant 0 : i32
    return %arg0, %c0_i32 : i32, i32
  }
  func.func @transform_2(%arg0: i32) -> (i32, i32) {
    %c0_i32 = arith.constant 0 : i32
    %c0_i32_0 = arith.constant 0 : i32
    %c0_i32_1 = arith.constant 0 : i32
    return %c0_i32, %c0_i32_0 : i32, i32
  }
  func.func @transform_3(%arg0: i32) -> (i32, i32) {
    %c0_i32 = arith.constant 0 : i32
    %c0_i32_0 = arith.constant 0 : i32
    %c0_i32_1 = arith.constant 0 : i32
    return %c0_i32, %c0_i32_0 : i32, i32
  }
  func.func @transform_4(%arg0: i32) -> (i32, i32) {
    %c0_i32 = arith.constant 0 : i32
    %c0_i32_0 = arith.constant 0 : i32
    %c0_i32_1 = arith.constant 0 : i32
    return %c0_i32, %c0_i32_0 : i32, i32
  }
  func.func @transform_5(%arg0: i32) -> (i32, i32) {
    %c0_i32 = arith.constant 0 : i32
    %c0_i32_0 = arith.constant 0 : i32
    return %arg0, %c0_i32 : i32, i32
  }
}

</mosaic_0001>

<llo_original>
// kernel: tpu_custom_call.1
$region0: #{tpu_custom_call.1}
  #allocation0 [shape = 'u32[]', space=smem, size = 0x4, offset = 0x4, fixed_abs, tag = 'smem constant byte address 0x4 - core index']
  #allocation1 [shape = 'u32[144,128]{1,0:T(1,128)}', space=vmem, size = 0x12000, scoped, tag = 'internal scratch']
  %s0 = inlined_call_operand.hbm [shape: f32[8,32], index: 0, kind: input, shape index: {}]
  %s1 = inlined_call_operand.hbm [shape: f32[8,32], index: 1, kind: input, shape index: {}]
  %s2 = inlined_call_operand.hbm [shape: f32[8,32], index: 2, kind: input, shape index: {}]
  %s3 = inlined_call_operand.vmem [shape: f32[8,32], index: 3, kind: input, shape index: {}]
  %s4 = inlined_call_operand.hbm [shape: f32[8,32], index: 4, kind: input, shape index: {}]
  %s5 = inlined_call_operand.vmem [shape: f32[8,1], index: 5, kind: output, shape index: {}]
  %s6 = sld [smem:[#allocation0]]
  $region46: #{tpu_custom_call.1} parent=0
    _
  %s8 = ssub.s32 1, %s6
  %s9 = scalar_select 0, %s8, %s6
  $region1: #{tpu_custom_call.1} parent=0
    #allocation2 [shape = 'u8[4096]{0}', space=vmem, size = 0x1000, scoped, tag = 'input window, operand 0, single buffered']
    #allocation3 [shape = 's32[1]{0}', space=sflag, size = 0x4, scoped, tag = 'scoped memory for tpu_custom_call.1']
    #allocation4 [shape = 'u8[4096]{0}', space=vmem, size = 0x1000, scoped, tag = 'input window, operand 1, single buffered']
    #allocation5 [shape = 's32[1]{0}', space=sflag, size = 0x4, scoped, tag = 'scoped memory for tpu_custom_call.1']
    #allocation6 [shape = 'u8[4096]{0}', space=vmem, size = 0x1000, scoped, tag = 'input window, operand 2, single buffered']
    #allocation7 [shape = 'u8[4096]{0}', space=vmem, size = 0x1000, scoped, tag = 'input window, operand 4, single buffered']
    #allocation8 [shape = 's32[1]{0}', space=sflag, size = 0x4, scoped, tag = 'scoped memory for tpu_custom_call.1']
    %10 = vsyncpa [#allocation3], 0
    %11 = vsyncpa [#allocation5], 0
    %12 = vsyncpa [#allocation8], 0
    // Predicated region
    $region2: #{tpu_custom_call.1} parent=1 // pred_check
      _
    $region3: #{tpu_custom_call.1} parent=1 // pred_check_branch
      %14 = sbr.rel (0) target = $region5
    $region4: #{tpu_custom_call.1} parent=1 // pred_region
      %s16 = ssub.s32 128, 128
      %17 = vsyncadd [#allocation3], %s16
      %s19 = sshll.u32 [#allocation2], 4
      %s20 = int_to_ptr.vmem [resolvable:$true] %s19
      %22 = dma.hbm_to_vmem [thread:$0]  %s0, 128, %s20, [#allocation3]
    $region5: #{tpu_custom_call.1} parent=1 // pred_fallthru
      _
    // Predicated region
    $region6: #{tpu_custom_call.1} parent=1 // pred_check
      _
    $region7: #{tpu_custom_call.1} parent=1 // pred_check_branch
      %24 = sbr.rel (0) target = $region9
    $region8: #{tpu_custom_call.1} parent=1 // pred_region
      %s26 = ssub.s32 128, 128
      %27 = vsyncadd [#allocation5], %s26
      %s29 = sshll.u32 [#allocation4], 4
      %s30 = int_to_ptr.vmem [resolvable:$true] %s29
      %32 = dma.hbm_to_vmem [thread:$0]  %s1, 128, %s30, [#allocation5]
    $region9: #{tpu_custom_call.1} parent=1 // pred_fallthru
      _
    // Predicated region
    $region10: #{tpu_custom_call.1} parent=1 // pred_check
      _
    $region11: #{tpu_custom_call.1} parent=1 // pred_check_branch
      %34 = sbr.rel (0) target = $region13
    $region12: #{tpu_custom_call.1} parent=1 // pred_region
      %s36 = ssub.s32 128, 128
      %37 = vsyncadd [#allocation5], %s36
      %s39 = sshll.u32 [#allocation6], 4
      %s40 = int_to_ptr.vmem [resolvable:$true] %s39
      %42 = dma.hbm_to_vmem [thread:$0]  %s2, 128, %s40, [#allocation5]
    $region13: #{tpu_custom_call.1} parent=1 // pred_fallthru
      _
    // Predicated region
    $region14: #{tpu_custom_call.1} parent=1 // pred_check
      _
    $region15: #{tpu_custom_call.1} parent=1 // pred_check_branch
      %44 = sbr.rel (0) target = $region17
    $region16: #{tpu_custom_call.1} parent=1 // pred_region
      _
    $region17: #{tpu_custom_call.1} parent=1 // pred_fallthru
      _
    // Predicated region
    $region18: #{tpu_custom_call.1} parent=1 // pred_check
      _
    $region19: #{tpu_custom_call.1} parent=1 // pred_check_branch
      %46 = sbr.rel (0) target = $region21
    $region20: #{tpu_custom_call.1} parent=1 // pred_region
      %s48 = ssub.s32 128, 128
      %49 = vsyncadd [#allocation8], %s48
      %s51 = sshll.u32 [#allocation7], 4
      %s52 = int_to_ptr.vmem [resolvable:$true] %s51
      %54 = dma.hbm_to_vmem [thread:$0]  %s4, 128, %s52, [#allocation8]
    $region21: #{tpu_custom_call.1} parent=1 // pred_fallthru
      _
    // Predicated region
    $region22: #{tpu_custom_call.1} parent=1 // pred_check
      _
    $region23: #{tpu_custom_call.1} parent=1 // pred_check_branch
      %56 = sbr.rel (0) target = $region25
    $region24: #{tpu_custom_call.1} parent=1 // pred_region
      %57 = dma.done [#allocation3], 128
    $region25: #{tpu_custom_call.1} parent=1 // pred_fallthru
      _
    // Predicated region
    $region26: #{tpu_custom_call.1} parent=1 // pred_check
      _
    $region27: #{tpu_custom_call.1} parent=1 // pred_check_branch
      %59 = sbr.rel (0) target = $region29
    $region28: #{tpu_custom_call.1} parent=1 // pred_region
      %60 = dma.done [#allocation5], 128
    $region29: #{tpu_custom_call.1} parent=1 // pred_fallthru
      _
    // Predicated region
    $region30: #{tpu_custom_call.1} parent=1 // pred_check
      _
    $region31: #{tpu_custom_call.1} parent=1 // pred_check_branch
      %62 = sbr.rel (0) target = $region33
    $region32: #{tpu_custom_call.1} parent=1 // pred_region
      %63 = dma.done [#allocation5], 128
    $region33: #{tpu_custom_call.1} parent=1 // pred_fallthru
      _
    // Predicated region
    $region34: #{tpu_custom_call.1} parent=1 // pred_check
      _
    $region35: #{tpu_custom_call.1} parent=1 // pred_check_branch
      %65 = sbr.rel (0) target = $region37
    $region36: #{tpu_custom_call.1} parent=1 // pred_region
      %66 = dma.done [#allocation8], 128
    $region37: #{tpu_custom_call.1} parent=1 // pred_fallthru
      _
    %v67 = vld [vmem:[#allocation2] sm:$0xff]
    %v68 = vmul.f32 %v67, %v67
    %vm69 = vcmask 261120
    %v70 = vsel %vm69, %v68, 0.0
    %71 = vadd.xlane.f32.xlu0 %v70
    %v72 = vpop.xlane.xlu0 %71
    %v73 = vmax.f32 %v72, 1e-24
    %v74 = vrsqrt.pop %v73
    %v75 = vmul.f32 %v67, %v74
    %v76 = vld [vmem:[#allocation4] sm:$0xff]
    %v77 = vmul.f32 %v76, %v76
    %v78 = vsel %vm69, %v77, 0.0
    %79 = vadd.xlane.f32.xlu0 %v78
    %v80 = vpop.xlane.xlu0 %79
    %v81 = vmax.f32 %v80, 1e-24
    %v82 = vrsqrt.pop %v81
    %v83 = vmul.f32 %v76, %v82
    %v84 = vld [vmem:[#allocation6] sm:$0xff]
    %v85 = vmul.f32 %v84, %v84
    %v86 = vsel %vm69, %v85, 0.0
    %87 = vadd.xlane.f32.xlu0 %v86
    %v88 = vpop.xlane.xlu0 %87
    %v89 = vmax.f32 %v88, 1e-24
    %v90 = vrsqrt.pop %v89
    %v91 = vmul.f32 %v84, %v90
    %v92 = vld [vmem:[%s3] sm:$0xff]
    %v93 = vmul.f32 %v92, %v92
    %v94 = vsel %vm69, %v93, 0.0
    %95 = vadd.xlane.f32.xlu0 %v94
    %v96 = vpop.xlane.xlu0 %95
    %v97 = vmax.f32 %v96, 1e-24
    %v98 = vrsqrt.pop %v97
    %v99 = vmul.f32 %v92, %v98
    %v100 = vld [vmem:[#allocation7] sm:$0xff]
    %v101 = vmul.f32 %v100, %v100
    %v102 = vsel %vm69, %v101, 0.0
    %103 = vadd.xlane.f32.xlu0 %v102
    %v104 = vpop.xlane.xlu0 %103
    %v105 = vmax.f32 %v104, 1e-24
    %v106 = vrsqrt.pop %v105
    %v107 = vmul.f32 %v100, %v106
    %v109 = vsel %vm69, %v75, 0
    %v112 = vsel %vm69, %v107, 0
    %114 = vmatprep.subr.mxu0 0.0
    %115 = vmatpush1.xpose.msra.mxu0 %v112
    %116 = vmatprep.subr.mxu0 0.0
    %117 = vmatpush1.xpose.msra.mxu0 0.0
    %118 = vmatprep.subr.mxu0 0.0
    %119 = vmatpush1.xpose.msra.mxu0 0.0
    %120 = vmatprep.subr.mxu0 0.0
    %121 = vmatpush1.xpose.msra.mxu0 0.0
    %122 = vmatprep.subr.mxu0 0.0
    %123 = vmatpush1.xpose.msra.mxu0 0.0
    %124 = vmatprep.subr.mxu0 0.0
    %125 = vmatpush1.xpose.msra.mxu0 0.0
    %126 = vmatprep.subr.mxu0 0.0
    %127 = vmatpush1.xpose.msra.mxu0 0.0
    %128 = vmatprep.subr.mxu0 0.0
    %129 = vmatpush1.xpose.msra.mxu0 0.0
    %130 = vmatprep.subr.mxu0 0.0
    %131 = vmatpush1.xpose.msra.mxu0 0.0
    %132 = vmatprep.subr.mxu0 0.0
    %133 = vmatpush1.xpose.msra.mxu0 0.0
    %134 = vmatprep.subr.mxu0 0.0
    %135 = vmatpush1.xpose.msra.mxu0 0.0
    %136 = vmatprep.subr.mxu0 0.0
    %137 = vmatpush1.xpose.msra.mxu0 0.0
    %138 = vmatprep.subr.mxu0 0.0
    %139 = vmatpush1.xpose.msra.mxu0 0.0
    %140 = vmatprep.subr.mxu0 0.0
    %141 = vmatpush1.xpose.msra.mxu0 0.0
    %142 = vmatprep.subr.mxu0 0.0
    %143 = vmatpush1.xpose.msra.mxu0 0.0
    %144 = vmatprep.subr.mxu0 0.0
    %145 = vmatpush1.xpose.msra.mxu0 0.0
    %146 = vmatprep.subr.mxu0 0.0
    %147 = vmatpush1.xpose.msra.mxu0 0.0
    %148 = vmatprep.subr.mxu0 0.0
    %149 = vmatpush1.xpose.msra.mxu0 0.0
    %150 = vmatprep.subr.mxu0 0.0
    %151 = vmatpush1.xpose.msra.mxu0 0.0
    %152 = vmatprep.subr.mxu0 0.0
    %153 = vmatpush1.xpose.msra.mxu0 0.0
    %154 = vmatprep.subr.mxu0 0.0
    %155 = vmatpush1.xpose.msra.mxu0 0.0
    %156 = vmatprep.subr.mxu0 0.0
    %157 = vmatpush1.xpose.msra.mxu0 0.0
    %158 = vmatprep.subr.mxu0 0.0
    %159 = vmatpush1.xpose.msra.mxu0 0.0
    %160 = vmatprep.subr.mxu0 0.0
    %161 = vmatpush1.xpose.msra.mxu0 0.0
    %162 = vmatprep.subr.mxu0 0.0
    %163 = vmatpush1.xpose.msra.mxu0 0.0
    %164 = vmatprep.subr.mxu0 0.0
    %165 = vmatpush1.xpose.msra.mxu0 0.0
    %166 = vmatprep.subr.mxu0 0.0
    %167 = vmatpush1.xpose.msra.mxu0 0.0
    %168 = vmatprep.subr.mxu0 0.0
    %169 = vmatpush1.xpose.msra.mxu0 0.0
    %170 = vmatprep.subr.mxu0 0.0
    %171 = vmatpush1.xpose.msra.mxu0 0.0
    %172 = vmatprep.subr.mxu0 0.0
    %173 = vmatpush1.xpose.msra.mxu0 0.0
    %174 = vmatprep.subr.mxu0 0.0
    %175 = vmatpush1.xpose.msra.mxu0 0.0
    %176 = vmatprep.subr.mxu0 0.0
    %177 = vmatpush1.xpose.msra.mxu0 0.0
    %178 = vmatprep.mubr.f32.mxu0 0.0
    %179 = vmatmul.mubr.f32.gmra.mrb[0].mxu0 %v109
    %v180 = vpop.f32.mrb[0].mxu0
    %v181 = vadd.f32 0.0, %v180
    %v182 = vpop.f32.mrb[0].mxu0
    %183 = vdwg.mxu0
    %v184 = vmul.f32 %v181, 1.442695
    %v185 = vpow.pop %v184
    %vm186 = vcmask 64512
    %v187 = vsel %vm186, %v185, 0.0
    %188 = vadd.xlane.f32.xlu0 %v187
    %v189 = vpop.xlane.xlu0 %188
    %v191 = vsel %vm69, %v99, 0
    %193 = vmatprep.subr.mxu0 0.0
    %194 = vmatpush1.xpose.msra.mxu0 %v191
    %195 = vmatprep.subr.mxu0 0.0
    %196 = vmatpush1.xpose.msra.mxu0 0.0
    %197 = vmatprep.subr.mxu0 0.0
    %198 = vmatpush1.xpose.msra.mxu0 0.0
    %199 = vmatprep.subr.mxu0 0.0
    %200 = vmatpush1.xpose.msra.mxu0 0.0
    %201 = vmatprep.subr.mxu0 0.0
    %202 = vmatpush1.xpose.msra.mxu0 0.0
    %203 = vmatprep.subr.mxu0 0.0
    %204 = vmatpush1.xpose.msra.mxu0 0.0
    %205 = vmatprep.subr.mxu0 0.0
    %206 = vmatpush1.xpose.msra.mxu0 0.0
    %207 = vmatprep.subr.mxu0 0.0
    %208 = vmatpush1.xpose.msra.mxu0 0.0
    %209 = vmatprep.subr.mxu0 0.0
    %210 = vmatpush1.xpose.msra.mxu0 0.0
    %211 = vmatprep.subr.mxu0 0.0
    %212 = vmatpush1.xpose.msra.mxu0 0.0
    %213 = vmatprep.subr.mxu0 0.0
    %214 = vmatpush1.xpose.msra.mxu0 0.0
    %215 = vmatprep.subr.mxu0 0.0
    %216 = vmatpush1.xpose.msra.mxu0 0.0
    %217 = vmatprep.subr.mxu0 0.0
    %218 = vmatpush1.xpose.msra.mxu0 0.0
    %219 = vmatprep.subr.mxu0 0.0
    %220 = vmatpush1.xpose.msra.mxu0 0.0
    %221 = vmatprep.subr.mxu0 0.0
    %222 = vmatpush1.xpose.msra.mxu0 0.0
    %223 = vmatprep.subr.mxu0 0.0
    %224 = vmatpush1.xpose.msra.mxu0 0.0
    %225 = vmatprep.subr.mxu0 0.0
    %226 = vmatpush1.xpose.msra.mxu0 0.0
    %227 = vmatprep.subr.mxu0 0.0
    %228 = vmatpush1.xpose.msra.mxu0 0.0
    %229 = vmatprep.subr.mxu0 0.0
    %230 = vmatpush1.xpose.msra.mxu0 0.0
    %231 = vmatprep.subr.mxu0 0.0
    %232 = vmatpush1.xpose.msra.mxu0 0.0
    %233 = vmatprep.subr.mxu0 0.0
    %234 = vmatpush1.xpose.msra.mxu0 0.0
    %235 = vmatprep.subr.mxu0 0.0
    %236 = vmatpush1.xpose.msra.mxu0 0.0
    %237 = vmatprep.subr.mxu0 0.0
    %238 = vmatpush1.xpose.msra.mxu0 0.0
    %239 = vmatprep.subr.mxu0 0.0
    %240 = vmatpush1.xpose.msra.mxu0 0.0
    %241 = vmatprep.subr.mxu0 0.0
    %242 = vmatpush1.xpose.msra.mxu0 0.0
    %243 = vmatprep.subr.mxu0 0.0
    %244 = vmatpush1.xpose.msra.mxu0 0.0
    %245 = vmatprep.subr.mxu0 0.0
    %246 = vmatpush1.xpose.msra.mxu0 0.0
    %247 = vmatprep.subr.mxu0 0.0
    %248 = vmatpush1.xpose.msra.mxu0 0.0
    %249 = vmatprep.subr.mxu0 0.0
    %250 = vmatpush1.xpose.msra.mxu0 0.0
    %251 = vmatprep.subr.mxu0 0.0
    %252 = vmatpush1.xpose.msra.mxu0 0.0
    %253 = vmatprep.subr.mxu0 0.0
    %254 = vmatpush1.xpose.msra.mxu0 0.0
    %255 = vmatprep.subr.mxu0 0.0
    %256 = vmatpush1.xpose.msra.mxu0 0.0
    %257 = vmatprep.mubr.f32.mxu0 0.0
    %258 = vmatmul.mubr.f32.gmra.mrb[0].mxu0 %v109
    %v259 = vpop.f32.mrb[0].mxu0
    %v260 = vadd.f32 0.0, %v259
    %v261 = vpop.f32.mrb[0].mxu0
    %262 = vdwg.mxu0
    %v263 = vmul.f32 %v260, 1.442695
    %v264 = vpow.pop %v263
    %v265 = vsel %vm186, %v264, 0.0
    %266 = vadd.xlane.f32.xlu0 %v265
    %v267 = vpop.xlane.xlu0 %266
    %v268 = vadd.f32 %v189, %v267
    %v270 = vsel %vm69, %v91, 0
    %272 = vmatprep.subr.mxu0 0.0
    %273 = vmatpush1.xpose.msra.mxu0 %v270
    %274 = vmatprep.subr.mxu0 0.0
    %275 = vmatpush1.xpose.msra.mxu0 0.0
    %276 = vmatprep.subr.mxu0 0.0
    %277 = vmatpush1.xpose.msra.mxu0 0.0
    %278 = vmatprep.subr.mxu0 0.0
    %279 = vmatpush1.xpose.msra.mxu0 0.0
    %280 = vmatprep.subr.mxu0 0.0
    %281 = vmatpush1.xpose.msra.mxu0 0.0
    %282 = vmatprep.subr.mxu0 0.0
    %283 = vmatpush1.xpose.msra.mxu0 0.0
    %284 = vmatprep.subr.mxu0 0.0
    %285 = vmatpush1.xpose.msra.mxu0 0.0
    %286 = vmatprep.subr.mxu0 0.0
    %287 = vmatpush1.xpose.msra.mxu0 0.0
    %288 = vmatprep.subr.mxu0 0.0
    %289 = vmatpush1.xpose.msra.mxu0 0.0
    %290 = vmatprep.subr.mxu0 0.0
    %291 = vmatpush1.xpose.msra.mxu0 0.0
    %292 = vmatprep.subr.mxu0 0.0
    %293 = vmatpush1.xpose.msra.mxu0 0.0
    %294 = vmatprep.subr.mxu0 0.0
    %295 = vmatpush1.xpose.msra.mxu0 0.0
    %296 = vmatprep.subr.mxu0 0.0
    %297 = vmatpush1.xpose.msra.mxu0 0.0
    %298 = vmatprep.subr.mxu0 0.0
    %299 = vmatpush1.xpose.msra.mxu0 0.0
    %300 = vmatprep.subr.mxu0 0.0
    %301 = vmatpush1.xpose.msra.mxu0 0.0
    %302 = vmatprep.subr.mxu0 0.0
    %303 = vmatpush1.xpose.msra.mxu0 0.0
    %304 = vmatprep.subr.mxu0 0.0
    %305 = vmatpush1.xpose.msra.mxu0 0.0
    %306 = vmatprep.subr.mxu0 0.0
    %307 = vmatpush1.xpose.msra.mxu0 0.0
    %308 = vmatprep.subr.mxu0 0.0
    %309 = vmatpush1.xpose.msra.mxu0 0.0
    %310 = vmatprep.subr.mxu0 0.0
    %311 = vmatpush1.xpose.msra.mxu0 0.0
    %312 = vmatprep.subr.mxu0 0.0
    %313 = vmatpush1.xpose.msra.mxu0 0.0
    %314 = vmatprep.subr.mxu0 0.0
    %315 = vmatpush1.xpose.msra.mxu0 0.0
    %316 = vmatprep.subr.mxu0 0.0
    %317 = vmatpush1.xpose.msra.mxu0 0.0
    %318 = vmatprep.subr.mxu0 0.0
    %319 = vmatpush1.xpose.msra.mxu0 0.0
    %320 = vmatprep.subr.mxu0 0.0
    %321 = vmatpush1.xpose.msra.mxu0 0.0
    %322 = vmatprep.subr.mxu0 0.0
    %323 = vmatpush1.xpose.msra.mxu0 0.0
    %324 = vmatprep.subr.mxu0 0.0
    %325 = vmatpush1.xpose.msra.mxu0 0.0
    %326 = vmatprep.subr.mxu0 0.0
    %327 = vmatpush1.xpose.msra.mxu0 0.0
    %328 = vmatprep.subr.mxu0 0.0
    %329 = vmatpush1.xpose.msra.mxu0 0.0
    %330 = vmatprep.subr.mxu0 0.0
    %331 = vmatpush1.xpose.msra.mxu0 0.0
    %332 = vmatprep.subr.mxu0 0.0
    %333 = vmatpush1.xpose.msra.mxu0 0.0
    %334 = vmatprep.subr.mxu0 0.0
    %335 = vmatpush1.xpose.msra.mxu0 0.0
    %336 = vmatprep.mubr.f32.mxu0 0.0
    %337 = vmatmul.mubr.f32.gmra.mrb[0].mxu0 %v109
    %v338 = vpop.f32.mrb[0].mxu0
    %v339 = vadd.f32 0.0, %v338
    %v340 = vpop.f32.mrb[0].mxu0
    %341 = vdwg.mxu0
    %v342 = vmul.f32 %v75, %v75
    %v343 = vsel %vm69, %v342, 0.0
    %344 = vadd.xlane.f32.xlu0 %v343
    %v345 = vpop.xlane.xlu0 %344
    %v346 = vmul.f32 %v339, 1.442695
    %v347 = vpow.pop %v346
    %v348 = vsel %vm186, %v347, 0.0
    %349 = vadd.xlane.f32.xlu0 %v348
    %v350 = vpop.xlane.xlu0 %349
    %v351 = vadd.f32 %v268, %v350
    %v352 = vmul.f32 %v345, 1.442695
    %v353 = vpow.pop %v352
    %v354 = vsub.f32 %v351, %v353
    %v355 = vlog2.pop %v354
    %v356 = vmul.f32 %v355, 0.6931472
    %v357 = vlaneseq
    %v358 = vshrl.u32 %v357, 7
    %s359 = smul.u32 0, 8
    %v360 = vstv %s359
    %v361 = vadd.s32 %v358, %v360
    %v362 = vlaneseq
    %v363 = vand.u32 %v362, 127
    %vm364 = vcmp.eq.s32.totalorder %v361, %v363
    %v365 = vmul.f32 %v75, %v83
    %v366 = vsel %vm69, %v365, 0.0
    %367 = vadd.xlane.f32.xlu0 %v366
    %v368 = vpop.xlane.xlu0 %367
    %v369 = vsub.f32 %v356, %v368
    %v370 = vsel %vm364, 0.0, %v264
    %v371 = vsel %vm186, %v370, 0.0
    %372 = vadd.xlane.f32.xlu0 %v371
    %v373 = vpop.xlane.xlu0 %372
    %v374 = vrcp.pop %v373
    %v375 = vmul.f32 1.0, %v374
    %v376 = vmul.f32 %v370, %v375
    %v377 = vsub.f32 %v356, %v260
    %v378 = vmul.f32 %v377, %v376
    %v379 = vsel %vm186, %v378, 0.0
    %380 = vadd.xlane.f32.xlu0 %v379
    %v381 = vpop.xlane.xlu0 %380
    %v382 = vsel %vm364, 0.0, %v347
    %v383 = vsel %vm186, %v382, 0.0
    %384 = vadd.xlane.f32.xlu0 %v383
    %v385 = vpop.xlane.xlu0 %384
    %v386 = vrcp.pop %v385
    %v387 = vmul.f32 1.0, %v386
    %v388 = vmul.f32 %v382, %v387
    %v389 = vsub.f32 %v356, %v339
    %v390 = vmul.f32 %v389, %v388
    %v391 = vsel %vm186, %v390, 0.0
    %392 = vadd.xlane.f32.xlu0 %v391
    %v393 = vpop.xlane.xlu0 %392
    %v394 = vadd.f32 %v381, %v393
    %v395 = vmul.f32 %v394, 0.5
    %v396 = vadd.f32 %v369, %v395
    %v397 = vmul.f32 %v396, 0.5
    %vm398 = vcmask 7168
    %399 = vst.msk [vmem:[%s5] sm:$0xff] %vm398, %v397
    // Predicated region
    $region38: #{tpu_custom_call.1} parent=1 // pred_check
      _
    $region39: #{tpu_custom_call.1} parent=1 // pred_check_branch
      %401 = sbr.rel (0) target = $region41
    $region40: #{tpu_custom_call.1} parent=1 // pred_region
      _
    $region41: #{tpu_custom_call.1} parent=1 // pred_fallthru
      _
    // Predicated region
    $region42: #{tpu_custom_call.1} parent=1 // pred_check
      _
    $region43: #{tpu_custom_call.1} parent=1 // pred_check_branch
      %403 = sbr.rel (0) target = $region45
    $region44: #{tpu_custom_call.1} parent=1 // pred_region
      _
    $region45: #{tpu_custom_call.1} parent=1 // pred_fallthru
      _
    %404 = vsyncpa [#allocation3], 1
    %405 = vsyncpa [#allocation5], 1
    %406 = vsyncpa [#allocation8], 1

</llo_original>
